<compile_context>
chip_gen: v7x
topology: tpu7x:2x2x1
jax: 0.10.0
libtpu: 0.0.40
codegen_flags: <defaults>
</compile_context>

<pallas_src>
import jax
import jax.numpy as jnp
from jax.experimental import pallas as pl
from jax.experimental.pallas import tpu as pltpu


# ------------------------------- kernel --------------------------------------

def _matmul_bias_kernel(x_ref, wt_ref, bias_ref, o_ref):
    k = pl.program_id(2)
    partial = jnp.dot(x_ref[...], wt_ref[...], preferred_element_type=jnp.float32)

    @pl.when(k == 0)
    def _():
        # Initialize the resident accumulator with bias + first K-tile product:
        # saves a zeros store and a read-add-store bias epilogue per output tile.
        o_ref[...] = bias_ref[...] + partial

    @pl.when(k != 0)
    def _():
        o_ref[...] += partial


# ------------------------------ helpers --------------------------------------

_VMEM_BUDGET = 28 * 1024 * 1024   # target double-buffered footprint
_VMEM_LIMIT = 40 * 1024 * 1024    # explicit scoped-VMEM limit (ok on v5e/v6e/v7x)


def _round_up(x, m):
    return ((x + m - 1) // m) * m


def _vmem_footprint(tb, tn, tk, x_bytes):
    # double-buffered x, folded W^T, bias tiles + double-buffered f32 output tile
    return 2 * (tb * tk * x_bytes + tk * tn * x_bytes + tn * 4 + tb * tn * 4)


# ------------------------- one-time weight preparation ------------------------

def prepare_resblock(params, *, eps=1e-5, compute_dtype=jnp.bfloat16,
                     max_tn=512, max_tk=1024):
    """Fold BN into the Linear layer, cast, pad and pick N/K tiles.  Call once."""
    out_size, in_size = params["linear_w"].shape

    # ---- Fold BatchNorm1d (eval, running stats) into the Linear layer, in f32:
    #   (x*scale + shift) @ W^T + b  ==  x @ (scale[:,None]*W^T) + (shift @ W^T + b)
    # NOTE: assumes running_var is O(1); the fold happens in f32 and is cast once.
    scale = params["bn_gamma"] / jnp.sqrt(params["bn_running_var"] + eps)   # (in,)
    shift = params["bn_beta"] - params["bn_running_mean"] * scale           # (in,)
    w_t = params["linear_w"].T.astype(jnp.float32)                          # (in, out)
    wt_folded = w_t * scale[:, None]                                        # (in, out)
    bias_folded = params["linear_b"].astype(jnp.float32) + shift @ w_t      # (out,)

    # ---- N/K tile sizes (depend only on the layer shape / compute dtype) ------
    x_bytes = jnp.dtype(compute_dtype).itemsize
    sub = 16 if x_bytes == 2 else 8

    n128 = _round_up(out_size, 128)
    k128 = _round_up(in_size, 128)
    tn = min(max_tn, n128)
    if tn == n128 and n128 >= 256:
        # Guarantee >= 2 N tiles so the parallel grid has >= 2 points (v7x 2 TCs).
        tn = _round_up(n128 // 2, 128)
    tk = min(max_tk, k128)
    # Shrink K tile if even the minimum-batch footprint would blow the budget.
    while _vmem_footprint(sub, tn, tk, x_bytes) > _VMEM_BUDGET and tk > 256:
        tk = _round_up(tk // 2, 128)

    Np = _round_up(out_size, tn)
    Kp = _round_up(in_size, tk)

    wt_c = wt_folded.astype(compute_dtype)
    if (Kp, Np) != (in_size, out_size):
        wt_c = jnp.zeros((Kp, Np), compute_dtype).at[:in_size, :out_size].set(wt_c)
    bias_c = jnp.zeros((1, Np), jnp.float32).at[0, :out_size].set(bias_folded)

    return {
        "wt": wt_c,                 # (Kp, Np) compute_dtype, BN-folded W^T
        "bias": bias_c,             # (1, Np) f32, BN-folded bias
        "tn": tn, "tk": tk,
        "in_size": in_size, "out_size": out_size,
        "compute_dtype": compute_dtype,
    }


# ------------------------------- per-call apply -------------------------------

def resblock_apply(prepared, x, *, max_tb=512):
    """Eval-mode ResBlock forward.  x: (B, in_size) f32 -> (B, out_size) f32."""
    B, in_size = x.shape
    assert in_size == prepared["in_size"], "input feature size mismatch"

    dt = prepared["compute_dtype"]
    x_bytes = jnp.dtype(dt).itemsize
    sub = 16 if x_bytes == 2 else 8
    tn, tk = prepared["tn"], prepared["tk"]
    Kp, Np = prepared["wt"].shape
    out_size = prepared["out_size"]

    # Batch tile: grow toward the whole (padded) batch so the folded W^T streams
    # from HBM as few times as possible, while staying inside the VMEM budget.
    b_pad = _round_up(B, sub)
    tb = min(max_tb, b_pad)
    while tb < b_pad and _vmem_footprint(min(2 * tb, b_pad), tn, tk,
                                         x_bytes) <= _VMEM_BUDGET:
        tb = min(2 * tb, b_pad)
    Bp = _round_up(B, tb)

    x_c = x.astype(dt)
    if (Bp, Kp) != (B, in_size):
        x_c = jnp.zeros((Bp, Kp), dt).at[:B, :in_size].set(x_c)

    grid = (Bp // tb, Np // tn, Kp // tk)

    out = pl.pallas_call(
        _matmul_bias_kernel,
        out_shape=jax.ShapeDtypeStruct((Bp, Np), jnp.float32),
        grid=grid,
        in_specs=[
            pl.BlockSpec((tb, tk), lambda i, j, k: (i, k)),   # activation
            pl.BlockSpec((tk, tn), lambda i, j, k: (k, j)),   # BN-folded W^T
            pl.BlockSpec((1, tn), lambda i, j, k: (0, j)),    # BN-folded bias
        ],
        out_specs=pl.BlockSpec((tb, tn), lambda i, j, k: (i, j)),
        compiler_params=pltpu.CompilerParams(
            dimension_semantics=("parallel", "parallel", "arbitrary"),
            vmem_limit_bytes=_VMEM_LIMIT),
    )(x_c, prepared["wt"], prepared["bias"])

    if (Bp, Np) != (B, out_size):
        out = out[:B, :out_size]
    return out


def resblock_forward(x, params, *, eps=1e-5, compute_dtype=jnp.bfloat16,
                     max_tb=512):
    """One-shot convenience wrapper (for repeated calls, prepare once instead)."""
    prepared = prepare_resblock(params, eps=eps, compute_dtype=compute_dtype)
    return resblock_apply(prepared, x, max_tb=max_tb)


# ------------------------------- test harness --------------------------------

def init_params(key, in_size, out_size):
    k_w, k_b, k_g, k_be, k_rm, k_rv = jax.random.split(key, 6)
    bound = 1.0 / jnp.sqrt(in_size)
    return {
        "linear_w": jax.random.uniform(k_w, (out_size, in_size), jnp.float32,
                                       -bound, bound),
        "linear_b": jax.random.uniform(k_b, (out_size,), jnp.float32, -bound, bound),
        "bn_gamma": 1.0 + 0.1 * jax.random.normal(k_g, (in_size,), jnp.float32),
        "bn_beta": 0.1 * jax.random.normal(k_be, (in_size,), jnp.float32),
        "bn_running_mean": 0.1 * jax.random.normal(k_rm, (in_size,), jnp.float32),
        "bn_running_var": 1.0 + 0.1 * jax.random.uniform(k_rv, (in_size,),
                                                         jnp.float32),
    }


def _reference(x, params, eps=1e-5):
    scale = params["bn_gamma"] / jnp.sqrt(params["bn_running_var"] + eps)
    shift = params["bn_beta"] - params["bn_running_mean"] * scale
    x_bn = x * scale[None, :] + shift[None, :]
    return x_bn @ params["linear_w"].T + params["linear_b"][None, :]


if __name__ == "__main__":
    # Small shapes: exercises batch padding (8 -> 16), N split into 2 tiles
    # (384 -> 2 x 256 padded), and the output slice-back.
    B, in_size, out_size = 8, 256, 384
    key = jax.random.PRNGKey(0)
    k_x, k_p = jax.random.split(key)
    x = jax.random.normal(k_x, (B, in_size), jnp.float32)
    params = init_params(k_p, in_size, out_size)

    y_ref = _reference(x, params)

    # bf16 compute path (f32 accumulation): prepare once, apply.
    prepared_bf16 = prepare_resblock(params)                       # one-time fold/pad
    y_bf16 = jax.block_until_ready(resblock_apply(prepared_bf16, x))
    assert y_bf16.shape == (B, out_size)
    assert jnp.allclose(y_bf16, y_ref, atol=5e-2, rtol=5e-2), "bf16 path mismatch"

    # f32 compute path: tight tolerance.
    prepared_f32 = prepare_resblock(params, compute_dtype=jnp.float32)
    y_f32 = jax.block_until_ready(resblock_apply(prepared_f32, x))
    assert y_f32.shape == (B, out_size)
    assert jnp.allclose(y_f32, y_ref, atol=1e-4, rtol=1e-4), "f32 path mismatch"

    print("KERNEL_OK")
</pallas_src>

<mosaic_0001>
module attributes {stable_mosaic.version = 11 : i64} {
  func.func @_matmul_bias_kernel(%arg0: i32, %arg1: i32, %arg2: i32, %arg3: memref<16x256xbf16, #tpu.memory_space<vmem>>, %arg4: memref<256x256xbf16, #tpu.memory_space<vmem>>, %arg5: memref<1x256xf32, #tpu.memory_space<vmem>>, %arg6: memref<16x256xf32, #tpu.memory_space<vmem>>) attributes {dimension_semantics = [#tpu.dimension_semantics<parallel>, #tpu.dimension_semantics<parallel>, #tpu.dimension_semantics<arbitrary>], iteration_bounds = array<i64: 1, 2, 1>, scalar_prefetch = 0 : i64, scratch_operands = 0 : i64, tpu.core_type = #tpu.core_type<tc>, window_params = [{transform_indices = @transform_0, window_bounds = array<i64: 16, 256>}, {transform_indices = @transform_1, window_bounds = array<i64: 256, 256>}, {transform_indices = @transform_2, window_bounds = array<i64: 1, 256>}, {transform_indices = @transform_3, window_bounds = array<i64: 16, 256>}]} {
    %c0 = arith.constant 0 : index
    %c0_0 = arith.constant 0 : index
    %0 = vector.load %arg3[%c0, %c0_0] : memref<16x256xbf16, #tpu.memory_space<vmem>>, vector<16x256xbf16>
    %c0_1 = arith.constant 0 : index
    %c0_2 = arith.constant 0 : index
    %1 = vector.load %arg4[%c0_1, %c0_2] : memref<256x256xbf16, #tpu.memory_space<vmem>>, vector<256x256xbf16>
    %cst = arith.constant dense<0.000000e+00> : vector<16x256xf32>
    %2 = tpu.matmul %0, %1, %cst {dimension_numbers = #tpu.dot_dimension_numbers<[1], [0], [0], [1], [0, 0, 1, 1], [], []>} : vector<16x256xbf16>, vector<256x256xbf16>, vector<16x256xf32> -> vector<16x256xf32>
    %c0_i32 = arith.constant 0 : i32
    %3 = arith.cmpi eq, %arg2, %c0_i32 : i32
    %4 = arith.extui %3 : i1 to i32
    %c0_i32_3 = arith.constant 0 : i32
    %5 = arith.cmpi ne, %4, %c0_i32_3 : i32
    scf.if %5 {
      %c0_6 = arith.constant 0 : index
      %c0_7 = arith.constant 0 : index
      %9 = vector.load %arg5[%c0_6, %c0_7] : memref<1x256xf32, #tpu.memory_space<vmem>>, vector<1x256xf32>
      %10 = vector.broadcast %9 : vector<1x256xf32> to vector<16x256xf32>
      %11 = arith.addf %10, %2 : vector<16x256xf32>
      %c0_8 = arith.constant 0 : index
      %c0_9 = arith.constant 0 : index
      %12 = vector.load %arg6[%c0_8, %c0_9] : memref<16x256xf32, #tpu.memory_space<vmem>>, vector<16x256xf32>
      tpu.vector_store %arg6[%c0_8, %c0_9], %11 {strides = array<i32>} : memref<16x256xf32, #tpu.memory_space<vmem>>, vector<16x256xf32>,
    } else {
    }
    %c0_i32_4 = arith.constant 0 : i32
    %6 = arith.cmpi ne, %arg2, %c0_i32_4 : i32
    %7 = arith.extui %6 : i1 to i32
    %c0_i32_5 = arith.constant 0 : i32
    %8 = arith.cmpi ne, %7, %c0_i32_5 : i32
    scf.if %8 {
      %c0_6 = arith.constant 0 : index
      %c0_7 = arith.constant 0 : index
      %9 = vector.load %arg6[%c0_6, %c0_7] : memref<16x256xf32, #tpu.memory_space<vmem>>, vector<16x256xf32>
      %10 = arith.addf %9, %2 : vector<16x256xf32>
      %c0_8 = arith.constant 0 : index
      %c0_9 = arith.constant 0 : index
      %11 = vector.load %arg6[%c0_8, %c0_9] : memref<16x256xf32, #tpu.memory_space<vmem>>, vector<16x256xf32>
      tpu.vector_store %arg6[%c0_8, %c0_9], %10 {strides = array<i32>} : memref<16x256xf32, #tpu.memory_space<vmem>>, vector<16x256xf32>,
    } else {
    }
    return
  }
  func.func @transform_0(%arg0: i32, %arg1: i32, %arg2: i32) -> (i32, i32) {
    %c0_i32 = arith.constant 0 : i32
    return %arg0, %arg2 : i32, i32
  }
  func.func @transform_1(%arg0: i32, %arg1: i32, %arg2: i32) -> (i32, i32) {
    %c0_i32 = arith.constant 0 : i32
    return %arg2, %arg1 : i32, i32
  }
  func.func @transform_2(%arg0: i32, %arg1: i32, %arg2: i32) -> (i32, i32) {
    %c0_i32 = arith.constant 0 : i32
    %c0_i32_0 = arith.constant 0 : i32
    return %c0_i32, %arg1 : i32, i32
  }
  func.func @transform_3(%arg0: i32, %arg1: i32, %arg2: i32) -> (i32, i32) {
    %c0_i32 = arith.constant 0 : i32
    return %arg0, %arg1 : i32, i32
  }
}

</mosaic_0001>

<llo_original>
// kernel: tpu_custom_call.1
$region0: #{tpu_custom_call.1}
  #allocation0 [shape = 'u32[]', space=smem, size = 0x4, offset = 0x4, fixed_abs, tag = 'smem constant byte address 0x4 - core index']
  #allocation1 [shape = 'u32[144,128]{1,0:T(1,128)}', space=vmem, size = 0x12000, scoped, tag = 'internal scratch']
  %s0 = inlined_call_operand.hbm [shape: bf16[16,256], index: 0, kind: input, shape index: {}]
  %s1 = inlined_call_operand.hbm [shape: bf16[256,512], index: 1, kind: input, shape index: {}]
  %s2 = inlined_call_operand.vmem [shape: f32[1,512], index: 2, kind: input, shape index: {}]
  %s3 = inlined_call_operand.hbm [shape: f32[16,512], index: 3, kind: output, shape index: {}]
  %s4 = sld [smem:[#allocation0]]
  $region61: #{tpu_custom_call.1} parent=0
    _
  %s6 = ssub.s32 1, %s4
  %s7 = scalar_select 0, %s6, %s4
  $region1: #{tpu_custom_call.1} parent=0
    #allocation2 [shape = 'u8[8192]{0}', space=vmem, size = 0x2000, scoped, tag = 'input window, operand 0, single buffered']
    #allocation3 [shape = 's32[2]{0}', space=sflag, size = 0x8, scoped, tag = 'scoped memory for tpu_custom_call.1']
    #allocation4 [shape = 's32[2]{0}', space=sflag, size = 0x8, scoped, tag = 'scoped memory for tpu_custom_call.1']
    #allocation5 [shape = 'u8[262144]{0}', space=vmem, size = 0x40000, scoped, tag = 'input window, operand 1']
    #allocation6 [shape = 's32[2]{0}', space=sflag, size = 0x8, scoped, tag = 'scoped memory for tpu_custom_call.1']
    #allocation7 [shape = 'u8[32768]{0}', space=vmem, size = 0x8000, scoped, tag = 'output window, operand 0']
    %8 = vsyncpa [#allocation3], 0
    %9 = vsyncpa [#allocation6], 0
    %s10 = scalar_lea.sflag [#allocation6], 1
    %11 = vsyncpa %s10, 0
    %12 = vsyncpa [#allocation4], 0
    %s13 = scalar_lea.sflag [#allocation4], 1
    %14 = vsyncpa %s13, 0
    loop: start=0, step=1, limit=4
    $region2: #{tpu_custom_call.1} parent=1 // loop_pre_header
      _
    $region3: #{tpu_custom_call.1} parent=1 // loop_header
      %s16 = sphi 0, %s20
      %p17 = scmp.ge.s32.totalorder %s16, 4
      %s23 = sphi 0, %s42
      %s24 = sphi 0, %s38
      %s25 = sphi 0, %s34
      %s26 = sphi 0, %s23
      %s27 = sphi 0, %s24
      %s28 = sphi 0, %s25
      %s29 = sphi 0, %s26
      %s30 = sphi 0, %s27
      %s31 = sphi 0, %s28
      %s47 = sphi 0, %s49
      %s50 = sphi 0, %s47
      %s51 = sphi 0, %s50
      %s67 = sphi 0, %s51
      %s75 = sphi 0, %s77
      %s78 = sphi 0, %s75
      %s79 = sphi 0, %s78
      %s95 = sphi 0, %s79
      %s101 = sphi 0, %s103
      %s104 = sphi 0, %s101
      %s105 = sphi 0, %s104
      %s121 = sphi 0, %s105
      %s129 = sphi 0, %s131
      %s132 = sphi 0, %s129
      %s133 = sphi 0, %s132
      %s149 = sphi 0, %s133
    $region4: #{tpu_custom_call.1} parent=1 // loop_header_branch
      %19 = sbr.rel (%p17) target = $region8
    $region5: #{tpu_custom_call.1} parent=1 // loop_body
      %s21 = ssub.s32 %s16, 1
      %s22 = ssub.s32 %s16, 2
      %s32 = sadd.s32 1, %s25
      %p33 = scmp.ge.s32.totalorder %s32, 1
      %s34 = scalar_select %p33, 0, %s32
      %s35 = sadd.s32 1, %s24
      %s36 = scalar_select %p33, %s35, %s24
      %p37 = scmp.ge.s32.totalorder %s36, 2
      %s38 = scalar_select %p37, 0, %s36
      %s39 = sadd.s32 1, %s23
      %s40 = scalar_select %p37, %s39, %s23
      %p41 = scmp.ge.s32.totalorder %s40, 1
      %s42 = scalar_select %p41, 0, %s40
      %s43 = ssub.s32 %s23, %s42
      %s44 = ssub.s32 %s25, %s34
      %s45 = sor.u32 %s43, %s44
      %p46 = scmp.eq.s32.totalorder %s45, 0
      %s48 = sadd.s32 %s47, 1
      %s49 = scalar_select %p46, %s47, %s48
      %p52 = pneg %p46
      %p53 = scmp.eq.s32.totalorder %s16, 1
      %p54 = por %p52, %p53
      %p55 = scmp.ne.s32.totalorder %s47, %s50
      %p56 = scmp.eq.s32.totalorder %s16, 0
      %p57 = por %p55, %p56
      %p58 = scmp.ne.s32.totalorder %s47, %s50
      %p59 = scmp.eq.s32.totalorder %s21, 1
      %p60 = por %p58, %p59
      %p61 = scmp.ne.s32.totalorder %s50, %s51
      %p62 = scmp.eq.s32.totalorder %s21, 0
      %p63 = por %p61, %p62
      %p64 = scmp.ne.s32.totalorder %s50, %s51
      %p65 = scmp.eq.s32.totalorder %s22, 1
      %p66 = por %p64, %p65
      %p68 = scmp.ne.s32.totalorder %s51, %s67
      %p69 = scmp.eq.s32.totalorder %s22, 0
      %p70 = por %p68, %p69
      %s71 = ssub.s32 %s25, %s34
      %s72 = ssub.s32 %s24, %s38
      %s73 = sor.u32 %s71, %s72
      %p74 = scmp.eq.s32.totalorder %s73, 0
      %s76 = sadd.s32 %s75, 1
      %s77 = scalar_select %p74, %s75, %s76
      %p80 = pneg %p74
      %p81 = scmp.eq.s32.totalorder %s16, 1
      %p82 = por %p80, %p81
      %p83 = scmp.ne.s32.totalorder %s75, %s78
      %p84 = scmp.eq.s32.totalorder %s16, 0
      %p85 = por %p83, %p84
      %p86 = scmp.ne.s32.totalorder %s75, %s78
      %p87 = scmp.eq.s32.totalorder %s21, 1
      %p88 = por %p86, %p87
      %p89 = scmp.ne.s32.totalorder %s78, %s79
      %p90 = scmp.eq.s32.totalorder %s21, 0
      %p91 = por %p89, %p90
      %p92 = scmp.ne.s32.totalorder %s78, %s79
      %p93 = scmp.eq.s32.totalorder %s22, 1
      %p94 = por %p92, %p93
      %p96 = scmp.ne.s32.totalorder %s79, %s95
      %p97 = scmp.eq.s32.totalorder %s22, 0
      %p98 = por %p96, %p97
      %s99 = ssub.s32 %s24, %s38
      %p100 = scmp.eq.s32.totalorder %s99, 0
      %s102 = sadd.s32 %s101, 1
      %s103 = scalar_select %p100, %s101, %s102
      %p106 = pneg %p100
      %p107 = scmp.eq.s32.totalorder %s16, 1
      %p108 = por %p106, %p107
      %p109 = scmp.ne.s32.totalorder %s101, %s104
      %p110 = scmp.eq.s32.totalorder %s16, 0
      %p111 = por %p109, %p110
      %p112 = scmp.ne.s32.totalorder %s101, %s104
      %p113 = scmp.eq.s32.totalorder %s21, 1
      %p114 = por %p112, %p113
      %p115 = scmp.ne.s32.totalorder %s104, %s105
      %p116 = scmp.eq.s32.totalorder %s21, 0
      %p117 = por %p115, %p116
      %p118 = scmp.ne.s32.totalorder %s104, %s105
      %p119 = scmp.eq.s32.totalorder %s22, 1
      %p120 = por %p118, %p119
      %p122 = scmp.ne.s32.totalorder %s105, %s121
      %p123 = scmp.eq.s32.totalorder %s22, 0
      %p124 = por %p122, %p123
      %s125 = ssub.s32 %s23, %s42
      %s126 = ssub.s32 %s24, %s38
      %s127 = sor.u32 %s125, %s126
      %p128 = scmp.eq.s32.totalorder %s127, 0
      %s130 = sadd.s32 %s129, 1
      %s131 = scalar_select %p128, %s129, %s130
      %p134 = pneg %p128
      %p135 = scmp.eq.s32.totalorder %s16, 1
      %p136 = por %p134, %p135
      %p137 = scmp.ne.s32.totalorder %s129, %s132
      %p138 = scmp.eq.s32.totalorder %s16, 0
      %p139 = por %p137, %p138
      %p140 = scmp.ne.s32.totalorder %s129, %s132
      %p141 = scmp.eq.s32.totalorder %s21, 1
      %p142 = por %p140, %p141
      %p143 = scmp.ne.s32.totalorder %s132, %s133
      %p144 = scmp.eq.s32.totalorder %s21, 0
      %p145 = por %p143, %p144
      %p146 = scmp.ne.s32.totalorder %s132, %s133
      %p147 = scmp.eq.s32.totalorder %s22, 1
      %p148 = por %p146, %p147
      %p150 = scmp.ne.s32.totalorder %s133, %s149
      %p151 = scmp.eq.s32.totalorder %s22, 0
      %p152 = por %p150, %p151
      %p153 = scmp.le.s32.totalorder 1, %s16
      %p154 = scmp.lt.s32.totalorder %s16, 3
      %p155 = pnand %p153, %p154
      %p156 = pneg %p155
      // Predicated region
      $region9: #{tpu_custom_call.1} parent=5 // pred_check
        _
      $region10: #{tpu_custom_call.1} parent=5 // pred_check_branch
        %158 = sbr.rel (%p155) target = $region12
      $region11: #{tpu_custom_call.1} parent=5 // pred_region
        %s159 = ssub.s32 %s16, 1
        // Predicated region
        $region13: #{tpu_custom_call.1} parent=11 // pred_check
          %p160 = pneg %p63
        $region14: #{tpu_custom_call.1} parent=11 // pred_check_branch
          %162 = sbr.rel (%p160) target = $region16
        $region15: #{tpu_custom_call.1} parent=11 // pred_region
          %s163 = smul.u32 2, %s26
          %s164 = smul.u32 2, %s28
          %s166 = ssub.s32 256, 256
          %167 = vsyncadd [#allocation3], %s166
          %s168 = smul.addr %s163, 2
          %s169 = sadd.s32 %s164, %s168
          %s170 = smul.addr %s169, 64
          %s171 = scalar_lea.hbm %s0, %s170
          %s172 = sshll.u32 [#allocation2], 4
          %s173 = int_to_ptr.vmem [resolvable:$true] %s172
          %178 = dma.hbm_to_vmem [thread:$0]  %s171, 256, %s173, [#allocation3], 128, 128, 8
        $region16: #{tpu_custom_call.1} parent=11 // pred_fallthru
          _
      $region12: #{tpu_custom_call.1} parent=5 // pred_fallthru
        _
      %p179 = scmp.lt.s32.totalorder %s16, 2
      // Predicated region
      $region17: #{tpu_custom_call.1} parent=5 // pred_check
        %p180 = pneg %p179
      $region18: #{tpu_custom_call.1} parent=5 // pred_check_branch
        %182 = sbr.rel (%p180) target = $region20
      $region19: #{tpu_custom_call.1} parent=5 // pred_region
        // Predicated region
        $region21: #{tpu_custom_call.1} parent=19 // pred_check
          %p183 = pneg %p85
        $region22: #{tpu_custom_call.1} parent=19 // pred_check_branch
          %185 = sbr.rel (%p183) target = $region24
        $region23: #{tpu_custom_call.1} parent=19 // pred_region
          %s186 = sand.u32 %s75, 1
          %s187 = scalar_lea.sflag [#allocation6], %s186
          %s188 = sand.u32 %s75, 1
          %s189 = smul.addr %s188, 256
          %s190 = scalar_lea.vmem [#allocation5], %s189
          %s191 = smul.u32 32, %s25
          %s192 = smul.u32 2, %s24
          %s194 = ssub.s32 4096, 4096
          %195 = vsyncadd %s187, %s194
          %s196 = smul.addr %s191, 4
          %s197 = sadd.s32 %s192, %s196
          %s198 = smul.addr %s197, 64
          %s199 = scalar_lea.hbm %s1, %s198
          %s200 = sshll.u32 %s190, 4
          %s201 = int_to_ptr.vmem [resolvable:$true] %s200
          %206 = dma.hbm_to_vmem [thread:$0]  %s199, 4096, %s201, %s187, 256, 128, 8
        $region24: #{tpu_custom_call.1} parent=19 // pred_fallthru
          _
        // Predicated region
        $region25: #{tpu_custom_call.1} parent=19 // pred_check
          %p207 = pneg %p111
        $region26: #{tpu_custom_call.1} parent=19 // pred_check_branch
          %209 = sbr.rel (%p207) target = $region28
        $region27: #{tpu_custom_call.1} parent=19 // pred_region
          %s210 = smul.u32 2, %s24
          %p211 = scmp.lt.s32.totalorder %s210, 3
          %s212 = scalar_select %p211, %s210, 3
          %s213 = scalar_lea.vmem %s2, %s212
          %s214 = smul.u32 2, %s24
        $region28: #{tpu_custom_call.1} parent=19 // pred_fallthru
          _
      $region20: #{tpu_custom_call.1} parent=5 // pred_fallthru
        _
      %p215 = scmp.le.s32.totalorder 1, %s16
      %p216 = scmp.lt.s32.totalorder %s16, 3
      %p217 = pnand %p215, %p216
      %p218 = pneg %p217
      // Predicated region
      $region29: #{tpu_custom_call.1} parent=5 // pred_check
        _
      $region30: #{tpu_custom_call.1} parent=5 // pred_check_branch
        %220 = sbr.rel (%p217) target = $region32
      $region31: #{tpu_custom_call.1} parent=5 // pred_region
        %s221 = ssub.s32 %s16, 1
        // Predicated region
        $region33: #{tpu_custom_call.1} parent=31 // pred_check
          %p222 = pneg %p63
        $region34: #{tpu_custom_call.1} parent=31 // pred_check_branch
          %224 = sbr.rel (%p222) target = $region36
        $region35: #{tpu_custom_call.1} parent=31 // pred_region
          %225 = dma.done [#allocation3], 256
        $region36: #{tpu_custom_call.1} parent=31 // pred_fallthru
          _
        %s226 = sand.u32 %s78, 1
        %s227 = scalar_lea.sflag [#allocation6], %s226
        %s228 = sand.u32 %s78, 1
        %s229 = smul.addr %s228, 256
        %s230 = scalar_lea.vmem [#allocation5], %s229
        // Predicated region
        $region37: #{tpu_custom_call.1} parent=31 // pred_check
          %p231 = pneg %p91
        $region38: #{tpu_custom_call.1} parent=31 // pred_check_branch
          %233 = sbr.rel (%p231) target = $region40
        $region39: #{tpu_custom_call.1} parent=31 // pred_region
          %234 = dma.done %s227, 4096
        $region40: #{tpu_custom_call.1} parent=31 // pred_fallthru
          _
        %p235 = pneg %p63
        %p236 = pneg %p60
        %s237 = sand.u32 %s78, 1
        %s238 = scalar_lea.sflag [#allocation6], %s237
        %s239 = sand.u32 %s78, 1
        %s240 = smul.addr %s239, 256
        %s241 = scalar_lea.vmem [#allocation5], %s240
        %p242 = pneg %p91
        %p243 = pneg %p88
        %s244 = smul.u32 2, %s27
        %p245 = scmp.lt.s32.totalorder %s244, 3
        %s246 = scalar_select %p245, %s244, 3
        %s247 = scalar_lea.vmem %s2, %s246
        %p248 = pneg %p117
        %p249 = pneg %p114
        %p250 = pneg %p145
        %p251 = pneg %p142
        %s252 = sand.u32 %s132, 1
        %s253 = scalar_lea.sflag [#allocation4], %s252
        %s254 = sand.u32 %s132, 1
        %s255 = smul.addr %s254, 32
        %s256 = scalar_lea.vmem [#allocation7], %s255
        %s257 = smul.u32 2, %s26
        %s258 = smul.u32 2, %s28
        %s259 = smul.u32 32, %s28
        %s260 = smul.u32 2, %s27
        %s261 = smul.u32 2, %s27
        %p262 = scmp.lt.s32.totalorder %s261, 3
        %s263 = scalar_select %p262, %s261, 3
        %s264 = scalar_lea.vmem %s2, %s263
        %s265 = smul.u32 2, %s27
        %s266 = smul.u32 2, %s26
        %s267 = smul.u32 2, %s27
        %v268 = vld [vmem:[#allocation2] sm:$0xff]
        %v269 = vld [vmem:[#allocation2 + $0x8] sm:$0xff]
        %v270 = vld [vmem:[%s230] sm:$0xff]
        %v271 = vld [vmem:[%s230 + $0x8] sm:$0xff]
        %v272 = vld [vmem:[%s230 + $0x10] sm:$0xff]
        %v273 = vld [vmem:[%s230 + $0x18] sm:$0xff]
        %v274 = vld [vmem:[%s230 + $0x20] sm:$0xff]
        %v275 = vld [vmem:[%s230 + $0x28] sm:$0xff]
        %v276 = vld [vmem:[%s230 + $0x30] sm:$0xff]
        %v277 = vld [vmem:[%s230 + $0x38] sm:$0xff]
        %v278 = vld [vmem:[%s230 + $0x40] sm:$0xff]
        %v279 = vld [vmem:[%s230 + $0x48] sm:$0xff]
        %v280 = vld [vmem:[%s230 + $0x50] sm:$0xff]
        %v281 = vld [vmem:[%s230 + $0x58] sm:$0xff]
        %v282 = vld [vmem:[%s230 + $0x60] sm:$0xff]
        %v283 = vld [vmem:[%s230 + $0x68] sm:$0xff]
        %v284 = vld [vmem:[%s230 + $0x70] sm:$0xff]
        %v285 = vld [vmem:[%s230 + $0x78] sm:$0xff]
        %v286 = vld [vmem:[%s230 + $0x80] sm:$0xff]
        %v287 = vld [vmem:[%s230 + $0x88] sm:$0xff]
        %v288 = vld [vmem:[%s230 + $0x90] sm:$0xff]
        %v289 = vld [vmem:[%s230 + $0x98] sm:$0xff]
        %v290 = vld [vmem:[%s230 + $0xa0] sm:$0xff]
        %v291 = vld [vmem:[%s230 + $0xa8] sm:$0xff]
        %v292 = vld [vmem:[%s230 + $0xb0] sm:$0xff]
        %v293 = vld [vmem:[%s230 + $0xb8] sm:$0xff]
        %v294 = vld [vmem:[%s230 + $0xc0] sm:$0xff]
        %v295 = vld [vmem:[%s230 + $0xc8] sm:$0xff]
        %v296 = vld [vmem:[%s230 + $0xd0] sm:$0xff]
        %v297 = vld [vmem:[%s230 + $0xd8] sm:$0xff]
        %v298 = vld [vmem:[%s230 + $0xe0] sm:$0xff]
        %v299 = vld [vmem:[%s230 + $0xe8] sm:$0xff]
        %v300 = vld [vmem:[%s230 + $0xf0] sm:$0xff]
        %v301 = vld [vmem:[%s230 + $0xf8] sm:$0xff]
        %v304 = vunpack.c.l.b16 %v268
        %v305 = vunpack.c.h.b16 %v268
        %v306 = vunpack.c.l.b16 %v269
        %v307 = vunpack.c.h.b16 %v269
        %v308 = vpack.c.b16 %v306, %v304
        %v309 = vpack.c.b16 %v307, %v305
        %v344 = vunpack.c.l.b16 %v270
        %v345 = vunpack.c.h.b16 %v270
        %v346 = vunpack.c.l.b16 %v271
        %v347 = vunpack.c.h.b16 %v271
        %v348 = vunpack.c.l.b16 %v272
        %v349 = vunpack.c.h.b16 %v272
        %v350 = vunpack.c.l.b16 %v273
        %v351 = vunpack.c.h.b16 %v273
        %v352 = vunpack.c.l.b16 %v274
        %v353 = vunpack.c.h.b16 %v274
        %v354 = vunpack.c.l.b16 %v275
        %v355 = vunpack.c.h.b16 %v275
        %v356 = vunpack.c.l.b16 %v276
        %v357 = vunpack.c.h.b16 %v276
        %v358 = vunpack.c.l.b16 %v277
        %v359 = vunpack.c.h.b16 %v277
        %v360 = vunpack.c.l.b16 %v278
        %v361 = vunpack.c.h.b16 %v278
        %v362 = vunpack.c.l.b16 %v279
        %v363 = vunpack.c.h.b16 %v279
        %v364 = vunpack.c.l.b16 %v280
        %v365 = vunpack.c.h.b16 %v280
        %v366 = vunpack.c.l.b16 %v281
        %v367 = vunpack.c.h.b16 %v281
        %v368 = vunpack.c.l.b16 %v282
        %v369 = vunpack.c.h.b16 %v282
        %v370 = vunpack.c.l.b16 %v283
        %v371 = vunpack.c.h.b16 %v283
        %v372 = vunpack.c.l.b16 %v284
        %v373 = vunpack.c.h.b16 %v284
        %v374 = vunpack.c.l.b16 %v285
        %v375 = vunpack.c.h.b16 %v285
        %v376 = vunpack.c.l.b16 %v286
        %v377 = vunpack.c.h.b16 %v286
        %v378 = vunpack.c.l.b16 %v287
        %v379 = vunpack.c.h.b16 %v287
        %v380 = vunpack.c.l.b16 %v288
        %v381 = vunpack.c.h.b16 %v288
        %v382 = vunpack.c.l.b16 %v289
        %v383 = vunpack.c.h.b16 %v289
        %v384 = vunpack.c.l.b16 %v290
        %v385 = vunpack.c.h.b16 %v290
        %v386 = vunpack.c.l.b16 %v291
        %v387 = vunpack.c.h.b16 %v291
        %v388 = vunpack.c.l.b16 %v292
        %v389 = vunpack.c.h.b16 %v292
        %v390 = vunpack.c.l.b16 %v293
        %v391 = vunpack.c.h.b16 %v293
        %v392 = vunpack.c.l.b16 %v294
        %v393 = vunpack.c.h.b16 %v294
        %v394 = vunpack.c.l.b16 %v295
        %v395 = vunpack.c.h.b16 %v295
        %v396 = vunpack.c.l.b16 %v296
        %v397 = vunpack.c.h.b16 %v296
        %v398 = vunpack.c.l.b16 %v297
        %v399 = vunpack.c.h.b16 %v297
        %v400 = vunpack.c.l.b16 %v298
        %v401 = vunpack.c.h.b16 %v298
        %v402 = vunpack.c.l.b16 %v299
        %v403 = vunpack.c.h.b16 %v299
        %v404 = vunpack.c.l.b16 %v300
        %v405 = vunpack.c.h.b16 %v300
        %v406 = vunpack.c.l.b16 %v301
        %v407 = vunpack.c.h.b16 %v301
        %v408 = vpack.c.b16 %v346, %v344
        %v409 = vpack.c.b16 %v347, %v345
        %v410 = vpack.c.b16 %v350, %v348
        %v411 = vpack.c.b16 %v351, %v349
        %v412 = vpack.c.b16 %v354, %v352
        %v413 = vpack.c.b16 %v355, %v353
        %v414 = vpack.c.b16 %v358, %v356
        %v415 = vpack.c.b16 %v359, %v357
        %v416 = vpack.c.b16 %v362, %v360
        %v417 = vpack.c.b16 %v363, %v361
        %v418 = vpack.c.b16 %v366, %v364
        %v419 = vpack.c.b16 %v367, %v365
        %v420 = vpack.c.b16 %v370, %v368
        %v421 = vpack.c.b16 %v371, %v369
        %v422 = vpack.c.b16 %v374, %v372
        %v423 = vpack.c.b16 %v375, %v373
        %v424 = vpack.c.b16 %v378, %v376
        %v425 = vpack.c.b16 %v379, %v377
        %v426 = vpack.c.b16 %v382, %v380
        %v427 = vpack.c.b16 %v383, %v381
        %v428 = vpack.c.b16 %v386, %v384
        %v429 = vpack.c.b16 %v387, %v385
        %v430 = vpack.c.b16 %v390, %v388
        %v431 = vpack.c.b16 %v391, %v389
        %v432 = vpack.c.b16 %v394, %v392
        %v433 = vpack.c.b16 %v395, %v393
        %v434 = vpack.c.b16 %v398, %v396
        %v435 = vpack.c.b16 %v399, %v397
        %v436 = vpack.c.b16 %v402, %v400
        %v437 = vpack.c.b16 %v403, %v401
        %v438 = vpack.c.b16 %v406, %v404
        %v439 = vpack.c.b16 %v407, %v405
        %472 = vmatprep.subr.bf16.mxu0 %v409
        %473 = vmatpush1.bf16.msra.mxu0 %v408
        %474 = vmatprep.subr.bf16.mxu0 %v411
        %475 = vmatpush1.bf16.msra.mxu0 %v410
        %476 = vmatprep.subr.bf16.mxu0 %v413
        %477 = vmatpush1.bf16.msra.mxu0 %v412
        %478 = vmatprep.subr.bf16.mxu0 %v415
        %479 = vmatpush1.bf16.msra.mxu0 %v414
        %480 = vmatprep.subr.bf16.mxu0 %v417
        %481 = vmatpush1.bf16.msra.mxu0 %v416
        %482 = vmatprep.subr.bf16.mxu0 %v419
        %483 = vmatpush1.bf16.msra.mxu0 %v418
        %484 = vmatprep.subr.bf16.mxu0 %v421
        %485 = vmatpush1.bf16.msra.mxu0 %v420
        %486 = vmatprep.subr.bf16.mxu0 %v423
        %487 = vmatpush1.bf16.msra.mxu0 %v422
        %488 = vmatprep.subr.bf16.mxu0 %v425
        %489 = vmatpush1.bf16.msra.mxu0 %v424
        %490 = vmatprep.subr.bf16.mxu0 %v427
        %491 = vmatpush1.bf16.msra.mxu0 %v426
        %492 = vmatprep.subr.bf16.mxu0 %v429
        %493 = vmatpush1.bf16.msra.mxu0 %v428
        %494 = vmatprep.subr.bf16.mxu0 %v431
        %495 = vmatpush1.bf16.msra.mxu0 %v430
        %496 = vmatprep.subr.bf16.mxu0 %v433
        %497 = vmatpush1.bf16.msra.mxu0 %v432
        %498 = vmatprep.subr.bf16.mxu0 %v435
        %499 = vmatpush1.bf16.msra.mxu0 %v434
        %500 = vmatprep.subr.bf16.mxu0 %v437
        %501 = vmatpush1.bf16.msra.mxu0 %v436
        %502 = vmatprep.subr.bf16.mxu0 %v439
        %503 = vmatpush1.bf16.msra.mxu0 %v438
        %504 = vmatprep.mubr.bf16.mxu0 %v309
        %505 = vmatmul.mubr.bf16.gmra.mrb[0].mxu0 %v308
        %v506 = vpop.f32.mrb[0].mxu0
        %v507 = vadd.f32 0.0, %v506
        %v508 = vpop.f32.mrb[0].mxu0
        %v509 = vadd.f32 0.0, %v508
        %v510 = vpop.f32.mrb[0].mxu0
        %v511 = vadd.f32 0.0, %v510
        %v512 = vpop.f32.mrb[0].mxu0
        %v513 = vadd.f32 0.0, %v512
        %514 = vdwg.mxu0
        %p515 = scmp.eq.s32.totalorder %s28, 0
        // Predicated region
        $region41: #{tpu_custom_call.1} parent=31 // pred_check
          %p516 = pneg %p515
        $region42: #{tpu_custom_call.1} parent=31 // pred_check_branch
          %518 = sbr.rel (%p516) target = $region44
        $region43: #{tpu_custom_call.1} parent=31 // pred_region
          %v519 = vld [vmem:[%s264] sm:$0x3]
          %v521 = vlaneseq
          %v522 = vshrl.u32 %v521, 7
          %v523 = vsub.s32 0, %v522
          %v524 = vrot.slane %v519, %v523
          %v525 = vlaneseq
          %v526 = vshrl.u32 %v525, 7
          %v527 = vsub.s32 1, %v526
          %v528 = vrot.slane %v519, %v527
          %v531 = vadd.f32 %v524, %v507
          %v532 = vadd.f32 %v528, %v509
          %v533 = vadd.f32 %v524, %v511
          %v534 = vadd.f32 %v528, %v513
          %535 = vst [vmem:[%s256] sm:$0xff] %v531
          %536 = vst [vmem:[%s256 + $0x8] sm:$0xff] %v532
          %537 = vst [vmem:[%s256 + $0x10] sm:$0xff] %v533
          %538 = vst [vmem:[%s256 + $0x18] sm:$0xff] %v534
        $region44: #{tpu_custom_call.1} parent=31 // pred_fallthru
          _
        %p539 = scmp.ne.s32.totalorder %s28, 0
        // Predicated region
        $region45: #{tpu_custom_call.1} parent=31 // pred_check
          %p540 = pneg %p539
        $region46: #{tpu_custom_call.1} parent=31 // pred_check_branch
          %542 = sbr.rel (%p540) target = $region48
        $region47: #{tpu_custom_call.1} parent=31 // pred_region
          %v543 = vld [vmem:[%s256] sm:$0xff]
          %v544 = vld [vmem:[%s256 + $0x8] sm:$0xff]
          %v545 = vld [vmem:[%s256 + $0x10] sm:$0xff]
          %v546 = vld [vmem:[%s256 + $0x18] sm:$0xff]
          %v547 = vadd.f32 %v543, %v507
          %v548 = vadd.f32 %v544, %v509
          %v549 = vadd.f32 %v545, %v511
          %v550 = vadd.f32 %v546, %v513
          %551 = vst [vmem:[%s256] sm:$0xff] %v547
          %552 = vst [vmem:[%s256 + $0x8] sm:$0xff] %v548
          %553 = vst [vmem:[%s256 + $0x10] sm:$0xff] %v549
          %554 = vst [vmem:[%s256 + $0x18] sm:$0xff] %v550
        $region48: #{tpu_custom_call.1} parent=31 // pred_fallthru
          _
        %s555 = sand.u32 %s132, 1
        %s556 = scalar_lea.sflag [#allocation4], %s555
        %s557 = sand.u32 %s132, 1
        %s558 = smul.addr %s557, 32
        %s559 = scalar_lea.vmem [#allocation7], %s558
        // Predicated region
        $region49: #{tpu_custom_call.1} parent=31 // pred_check
          %p560 = pneg %p142
        $region50: #{tpu_custom_call.1} parent=31 // pred_check_branch
          %562 = sbr.rel (%p560) target = $region52
        $region51: #{tpu_custom_call.1} parent=31 // pred_region
          %s563 = smul.u32 2, %s26
          %s564 = smul.u32 2, %s27
          %s566 = ssub.s32 512, 512
          %567 = vsyncadd %s556, %s566
          %s568 = smul.addr %s563, 4
          %s569 = sadd.s32 %s564, %s568
          %s570 = smul.addr %s569, 128
          %s571 = scalar_lea.hbm %s3, %s570
          %s572 = sshll.u32 %s559, 4
          %s573 = int_to_ptr.vmem [resolvable:$true] %s572
          %578 = dma.vmem_to_hbm [thread:$0]  %s573, 512, %s571, %s556, 256, 512, 16
        $region52: #{tpu_custom_call.1} parent=31 // pred_fallthru
          _
      $region32: #{tpu_custom_call.1} parent=5 // pred_fallthru
        _
      %p579 = scmp.le.s32.totalorder 2, %s16
      // Predicated region
      $region53: #{tpu_custom_call.1} parent=5 // pred_check
        %p580 = pneg %p579
      $region54: #{tpu_custom_call.1} parent=5 // pred_check_branch
        %582 = sbr.rel (%p580) target = $region56
      $region55: #{tpu_custom_call.1} parent=5 // pred_region
        %s583 = ssub.s32 %s16, 2
        // Predicated region
        $region57: #{tpu_custom_call.1} parent=55 // pred_check
          %p584 = pneg %p148
        $region58: #{tpu_custom_call.1} parent=55 // pred_check_branch
          %586 = sbr.rel (%p584) target = $region60
        $region59: #{tpu_custom_call.1} parent=55 // pred_region
          %s587 = sand.u32 %s133, 1
          %s588 = scalar_lea.sflag [#allocation4], %s587
          %s589 = sand.u32 %s133, 1
          %s590 = smul.addr %s589, 32
          %s591 = scalar_lea.vmem [#allocation7], %s590
          %592 = dma.done %s588, 512
        $region60: #{tpu_custom_call.1} parent=55 // pred_fallthru
          _
      $region56: #{tpu_custom_call.1} parent=5 // pred_fallthru
        _
    $region6: #{tpu_custom_call.1} parent=1 // loop_footer
      %s20 = sadd.s32 1, %s16
    $region7: #{tpu_custom_call.1} parent=1 // loop_footer_branch
      %15 = sbr.rel target = $region3
    $region8: #{tpu_custom_call.1} parent=1 // loop_exit
      _
    %593 = vsyncpa [#allocation3], 1
    %s594 = scalar_lea.sflag [#allocation3], 1
    %595 = vsyncpa %s594, 1
    %596 = vsyncpa [#allocation6], 1
    %s597 = scalar_lea.sflag [#allocation6], 1
    %598 = vsyncpa %s597, 1
    %599 = vsyncpa [#allocation4], 1
    %s600 = scalar_lea.sflag [#allocation4], 1
    %601 = vsyncpa %s600, 1

</llo_original>
